<compile_context>
chip_gen: v7x
topology: tpu7x:2x2x1
jax: 0.10.0
libtpu: 0.0.40
codegen_flags: <defaults>
</compile_context>

<pallas_src>
import jax
import jax.numpy as jnp
from jax.experimental import pallas as pl
from jax.experimental.pallas import tpu as pltpu


def _linear4_lane_dense_kernel(w_ref, b_ref, xt_ref, ot_ref):
    # w_ref : (OUT, IN) f32 in SMEM   (read as scalars)
    # b_ref : (OUT,)    f32 in SMEM   (read as scalars)
    # xt_ref: (IN, TB)  f32 in VMEM   (batch on the lane axis)
    # ot_ref: (OUT, TB) f32 in VMEM   (lane-dense output)
    out_f, in_f = w_ref.shape
    # Load each input row once; (1, TB) lane-dense vectors.
    xs = [xt_ref[pl.ds(k, 1), :] for k in range(in_f)]
    rows = []
    for j in range(out_f):
        acc = xs[0] * w_ref[j, 0]
        for k in range(1, in_f):
            acc = acc + xs[k] * w_ref[j, k]
        rows.append(acc + b_ref[j])
    ot_ref[...] = jnp.concatenate(rows, axis=0)


def _linear4(x, weight, bias, *, max_tile=8192):
    """y = x @ weight.T + bias, computed lane-dense on the VPU.

    x: (B, IN) f32; weight: (OUT, IN) f32; bias: (OUT,) f32 -> (B, OUT) f32.
    """
    B, in_f = x.shape
    out_f = weight.shape[0]

    # Put the batch on the lane axis (layout plumbing only).
    x_t = x.T  # (IN, B)
    if B <= max_tile:
        tb, b_pad = B, B            # single block == full array dims (always legal)
    else:
        tb = max_tile               # multiple of 128 -> legal lane tiling
        b_pad = pl.cdiv(B, tb) * tb
        x_t = jnp.pad(x_t, ((0, 0), (0, b_pad - B)))

    out_t = pl.pallas_call(
        _linear4_lane_dense_kernel,
        out_shape=jax.ShapeDtypeStruct((out_f, b_pad), x.dtype),
        grid=(b_pad // tb,),
        in_specs=[
            pl.BlockSpec(memory_space=pltpu.MemorySpace.SMEM),   # weight (whole, SMEM)
            pl.BlockSpec(memory_space=pltpu.MemorySpace.SMEM),   # bias   (whole, SMEM)
            pl.BlockSpec((in_f, tb), lambda i: (0, i)),          # x.T tile
        ],
        out_specs=pl.BlockSpec((out_f, tb), lambda i: (0, i)),
        compiler_params=pltpu.CompilerParams(
            dimension_semantics=("parallel",),
        ),
    )(weight, bias, x_t)

    return out_t[:, :B].T


def level2_forward(x=None, y=None, *, weight_a, bias_a, weight_b=None, bias_b=None):
    """Mirror Level2.forward.

    x is not None -> layer1a.layer0 (weight_a, bias_a)
    x is None     -> layer1b        (weight_b, bias_b)
    """
    if x is not None and y is not None:
        raise ValueError("x and y set simultaneously")
    if x is not None:
        return _linear4(x, weight_a, bias_a)
    if weight_b is None or bias_b is None:
        raise ValueError("y path requires layer1b parameters (weight_b, bias_b)")
    return _linear4(y, weight_b, bias_b)


if __name__ == "__main__":
    key = jax.random.PRNGKey(0)
    kx, kwa, kba, kwb, kbb = jax.random.split(key, 5)

    B, IN, OUT = 8, 4, 4
    x = jax.random.normal(kx, (B, IN), dtype=jnp.float32)

    # Deterministic nn.Linear-style init: U(-1/sqrt(in), 1/sqrt(in))
    bound = 1.0 / jnp.sqrt(jnp.float32(IN))
    weight_a = jax.random.uniform(kwa, (OUT, IN), jnp.float32, -bound, bound)
    bias_a = jax.random.uniform(kba, (OUT,), jnp.float32, -bound, bound)
    weight_b = jax.random.uniform(kwb, (OUT, IN), jnp.float32, -bound, bound)
    bias_b = jax.random.uniform(kbb, (OUT,), jnp.float32, -bound, bound)

    # x path (layer1a)
    out_x = level2_forward(x, weight_a=weight_a, bias_a=bias_a)
    jax.block_until_ready(out_x)
    ref_x = x @ weight_a.T + bias_a
    assert out_x.shape == (B, OUT)
    assert jnp.allclose(out_x, ref_x, atol=1e-5), "x-path mismatch vs reference"

    # y path (layer1b)
    out_y = level2_forward(
        None, x, weight_a=weight_a, bias_a=bias_a, weight_b=weight_b, bias_b=bias_b
    )
    jax.block_until_ready(out_y)
    ref_y = x @ weight_b.T + bias_b
    assert out_y.shape == (B, OUT)
    assert jnp.allclose(out_y, ref_y, atol=1e-5), "y-path mismatch vs reference"

    print("KERNEL_OK")
</pallas_src>

<mosaic_0001>
module attributes {stable_mosaic.version = 11 : i64} {
  func.func @_linear4_lane_dense_kernel(%arg0: i32, %arg1: memref<4x4xf32, #tpu.memory_space<smem>>, %arg2: memref<4xf32, #tpu.memory_space<smem>>, %arg3: memref<4x8xf32, #tpu.memory_space<vmem>>, %arg4: memref<4x8xf32, #tpu.memory_space<vmem>>) attributes {dimension_semantics = [#tpu.dimension_semantics<parallel>], iteration_bounds = array<i64: 1>, scalar_prefetch = 0 : i64, scratch_operands = 0 : i64, tpu.core_type = #tpu.core_type<tc>, window_params = [{transform_indices = @transform_0, window_bounds = array<i64: 4, 4>}, {transform_indices = @transform_1, window_bounds = array<i64: 4>}, {transform_indices = @transform_2, window_bounds = array<i64: 4, 8>}, {transform_indices = @transform_3, window_bounds = array<i64: 4, 8>}]} {
    %c0 = arith.constant 0 : index
    %c0_0 = arith.constant 0 : index
    %0 = vector.load %arg3[%c0, %c0_0] : memref<4x8xf32, #tpu.memory_space<vmem>>, vector<1x8xf32>
    %c1 = arith.constant 1 : index
    %c0_1 = arith.constant 0 : index
    %1 = vector.load %arg3[%c1, %c0_1] : memref<4x8xf32, #tpu.memory_space<vmem>>, vector<1x8xf32>
    %c2 = arith.constant 2 : index
    %c0_2 = arith.constant 0 : index
    %2 = vector.load %arg3[%c2, %c0_2] : memref<4x8xf32, #tpu.memory_space<vmem>>, vector<1x8xf32>
    %c3 = arith.constant 3 : index
    %c0_3 = arith.constant 0 : index
    %3 = vector.load %arg3[%c3, %c0_3] : memref<4x8xf32, #tpu.memory_space<vmem>>, vector<1x8xf32>
    %c0_4 = arith.constant 0 : index
    %c0_5 = arith.constant 0 : index
    %4 = memref.load %arg1[%c0_4, %c0_5] : memref<4x4xf32, #tpu.memory_space<smem>>
    %5 = vector.broadcast %4 : f32 to vector<1x8xf32>
    %6 = arith.mulf %0, %5 : vector<1x8xf32>
    %c0_6 = arith.constant 0 : index
    %c1_7 = arith.constant 1 : index
    %7 = memref.load %arg1[%c0_6, %c1_7] : memref<4x4xf32, #tpu.memory_space<smem>>
    %8 = vector.broadcast %7 : f32 to vector<1x8xf32>
    %9 = arith.mulf %1, %8 : vector<1x8xf32>
    %10 = arith.addf %6, %9 : vector<1x8xf32>
    %c0_8 = arith.constant 0 : index
    %c2_9 = arith.constant 2 : index
    %11 = memref.load %arg1[%c0_8, %c2_9] : memref<4x4xf32, #tpu.memory_space<smem>>
    %12 = vector.broadcast %11 : f32 to vector<1x8xf32>
    %13 = arith.mulf %2, %12 : vector<1x8xf32>
    %14 = arith.addf %10, %13 : vector<1x8xf32>
    %c0_10 = arith.constant 0 : index
    %c3_11 = arith.constant 3 : index
    %15 = memref.load %arg1[%c0_10, %c3_11] : memref<4x4xf32, #tpu.memory_space<smem>>
    %16 = vector.broadcast %15 : f32 to vector<1x8xf32>
    %17 = arith.mulf %3, %16 : vector<1x8xf32>
    %18 = arith.addf %14, %17 : vector<1x8xf32>
    %c0_12 = arith.constant 0 : index
    %19 = memref.load %arg2[%c0_12] : memref<4xf32, #tpu.memory_space<smem>>
    %20 = vector.broadcast %19 : f32 to vector<1x8xf32>
    %21 = arith.addf %18, %20 : vector<1x8xf32>
    %c1_13 = arith.constant 1 : index
    %c0_14 = arith.constant 0 : index
    %22 = memref.load %arg1[%c1_13, %c0_14] : memref<4x4xf32, #tpu.memory_space<smem>>
    %23 = vector.broadcast %22 : f32 to vector<1x8xf32>
    %24 = arith.mulf %0, %23 : vector<1x8xf32>
    %c1_15 = arith.constant 1 : index
    %c1_16 = arith.constant 1 : index
    %25 = memref.load %arg1[%c1_15, %c1_16] : memref<4x4xf32, #tpu.memory_space<smem>>
    %26 = vector.broadcast %25 : f32 to vector<1x8xf32>
    %27 = arith.mulf %1, %26 : vector<1x8xf32>
    %28 = arith.addf %24, %27 : vector<1x8xf32>
    %c1_17 = arith.constant 1 : index
    %c2_18 = arith.constant 2 : index
    %29 = memref.load %arg1[%c1_17, %c2_18] : memref<4x4xf32, #tpu.memory_space<smem>>
    %30 = vector.broadcast %29 : f32 to vector<1x8xf32>
    %31 = arith.mulf %2, %30 : vector<1x8xf32>
    %32 = arith.addf %28, %31 : vector<1x8xf32>
    %c1_19 = arith.constant 1 : index
    %c3_20 = arith.constant 3 : index
    %33 = memref.load %arg1[%c1_19, %c3_20] : memref<4x4xf32, #tpu.memory_space<smem>>
    %34 = vector.broadcast %33 : f32 to vector<1x8xf32>
    %35 = arith.mulf %3, %34 : vector<1x8xf32>
    %36 = arith.addf %32, %35 : vector<1x8xf32>
    %c1_21 = arith.constant 1 : index
    %37 = memref.load %arg2[%c1_21] : memref<4xf32, #tpu.memory_space<smem>>
    %38 = vector.broadcast %37 : f32 to vector<1x8xf32>
    %39 = arith.addf %36, %38 : vector<1x8xf32>
    %c2_22 = arith.constant 2 : index
    %c0_23 = arith.constant 0 : index
    %40 = memref.load %arg1[%c2_22, %c0_23] : memref<4x4xf32, #tpu.memory_space<smem>>
    %41 = vector.broadcast %40 : f32 to vector<1x8xf32>
    %42 = arith.mulf %0, %41 : vector<1x8xf32>
    %c2_24 = arith.constant 2 : index
    %c1_25 = arith.constant 1 : index
    %43 = memref.load %arg1[%c2_24, %c1_25] : memref<4x4xf32, #tpu.memory_space<smem>>
    %44 = vector.broadcast %43 : f32 to vector<1x8xf32>
    %45 = arith.mulf %1, %44 : vector<1x8xf32>
    %46 = arith.addf %42, %45 : vector<1x8xf32>
    %c2_26 = arith.constant 2 : index
    %c2_27 = arith.constant 2 : index
    %47 = memref.load %arg1[%c2_26, %c2_27] : memref<4x4xf32, #tpu.memory_space<smem>>
    %48 = vector.broadcast %47 : f32 to vector<1x8xf32>
    %49 = arith.mulf %2, %48 : vector<1x8xf32>
    %50 = arith.addf %46, %49 : vector<1x8xf32>
    %c2_28 = arith.constant 2 : index
    %c3_29 = arith.constant 3 : index
    %51 = memref.load %arg1[%c2_28, %c3_29] : memref<4x4xf32, #tpu.memory_space<smem>>
    %52 = vector.broadcast %51 : f32 to vector<1x8xf32>
    %53 = arith.mulf %3, %52 : vector<1x8xf32>
    %54 = arith.addf %50, %53 : vector<1x8xf32>
    %c2_30 = arith.constant 2 : index
    %55 = memref.load %arg2[%c2_30] : memref<4xf32, #tpu.memory_space<smem>>
    %56 = vector.broadcast %55 : f32 to vector<1x8xf32>
    %57 = arith.addf %54, %56 : vector<1x8xf32>
    %c3_31 = arith.constant 3 : index
    %c0_32 = arith.constant 0 : index
    %58 = memref.load %arg1[%c3_31, %c0_32] : memref<4x4xf32, #tpu.memory_space<smem>>
    %59 = vector.broadcast %58 : f32 to vector<1x8xf32>
    %60 = arith.mulf %0, %59 : vector<1x8xf32>
    %c3_33 = arith.constant 3 : index
    %c1_34 = arith.constant 1 : index
    %61 = memref.load %arg1[%c3_33, %c1_34] : memref<4x4xf32, #tpu.memory_space<smem>>
    %62 = vector.broadcast %61 : f32 to vector<1x8xf32>
    %63 = arith.mulf %1, %62 : vector<1x8xf32>
    %64 = arith.addf %60, %63 : vector<1x8xf32>
    %c3_35 = arith.constant 3 : index
    %c2_36 = arith.constant 2 : index
    %65 = memref.load %arg1[%c3_35, %c2_36] : memref<4x4xf32, #tpu.memory_space<smem>>
    %66 = vector.broadcast %65 : f32 to vector<1x8xf32>
    %67 = arith.mulf %2, %66 : vector<1x8xf32>
    %68 = arith.addf %64, %67 : vector<1x8xf32>
    %c3_37 = arith.constant 3 : index
    %c3_38 = arith.constant 3 : index
    %69 = memref.load %arg1[%c3_37, %c3_38] : memref<4x4xf32, #tpu.memory_space<smem>>
    %70 = vector.broadcast %69 : f32 to vector<1x8xf32>
    %71 = arith.mulf %3, %70 : vector<1x8xf32>
    %72 = arith.addf %68, %71 : vector<1x8xf32>
    %c3_39 = arith.constant 3 : index
    %73 = memref.load %arg2[%c3_39] : memref<4xf32, #tpu.memory_space<smem>>
    %74 = vector.broadcast %73 : f32 to vector<1x8xf32>
    %75 = arith.addf %72, %74 : vector<1x8xf32>
    %76 = tpu.concatenate %21, %39, %57, %75 in 0 : vector<1x8xf32>, vector<1x8xf32>, vector<1x8xf32>, vector<1x8xf32> -> vector<4x8xf32>
    %c0_40 = arith.constant 0 : index
    %c0_41 = arith.constant 0 : index
    %77 = vector.load %arg4[%c0_40, %c0_41] : memref<4x8xf32, #tpu.memory_space<vmem>>, vector<4x8xf32>
    tpu.vector_store %arg4[%c0_40, %c0_41], %76 {strides = array<i32>} : memref<4x8xf32, #tpu.memory_space<vmem>>, vector<4x8xf32>,
    return
  }
  func.func @transform_0(%arg0: i32) -> (i32, i32) {
    %c0_i32 = arith.constant 0 : i32
    %c0_i32_0 = arith.constant 0 : i32
    %c0_i32_1 = arith.constant 0 : i32
    return %c0_i32, %c0_i32_0 : i32, i32
  }
  func.func @transform_1(%arg0: i32) -> i32 {
    %c0_i32 = arith.constant 0 : i32
    %c0_i32_0 = arith.constant 0 : i32
    return %c0_i32 : i32
  }
  func.func @transform_2(%arg0: i32) -> (i32, i32) {
    %c0_i32 = arith.constant 0 : i32
    %c0_i32_0 = arith.constant 0 : i32
    return %c0_i32, %arg0 : i32, i32
  }
  func.func @transform_3(%arg0: i32) -> (i32, i32) {
    %c0_i32 = arith.constant 0 : i32
    %c0_i32_0 = arith.constant 0 : i32
    return %c0_i32, %arg0 : i32, i32
  }
}

</mosaic_0001>

<llo_original>
// kernel: tpu_custom_call.1
$region0: #{tpu_custom_call.1}
  #allocation0 [shape = 'u32[]', space=smem, size = 0x4, offset = 0x4, fixed_abs, tag = 'smem constant byte address 0x4 - core index']
  #allocation1 [shape = 'u32[144,128]{1,0:T(1,128)}', space=vmem, size = 0x12000, scoped, tag = 'internal scratch']
  %s0 = inlined_call_operand.hbm [shape: f32[4,4], index: 0, kind: input, shape index: {}]
  %s1 = inlined_call_operand.vmem [shape: f32[4], index: 1, kind: input, shape index: {}]
  %s2 = inlined_call_operand.vmem [shape: f32[4,8], index: 2, kind: input, shape index: {}]
  %s3 = inlined_call_operand.hbm [shape: f32[4,8], index: 3, kind: output, shape index: {}]
  %s4 = sld [smem:[#allocation0]]
  $region30: #{tpu_custom_call.1} parent=0
    _
  %s6 = ssub.s32 1, %s4
  %s7 = scalar_select 0, %s6, %s4
  $region1: #{tpu_custom_call.1} parent=0
    #allocation2 [shape = 'u8[2048]{0}', space=smem, size = 0x800, scoped, tag = 'input window, operand 0, single buffered']
    #allocation3 [shape = 's32[1]{0}', space=sflag, size = 0x4, scoped, tag = 'scoped memory for tpu_custom_call.1']
    #allocation4 [shape = 's32[1]{0}', space=sflag, size = 0x4, scoped, tag = 'scoped memory for tpu_custom_call.1']
    #allocation5 [shape = 's32[1]{0}', space=sflag, size = 0x4, scoped, tag = 'scoped memory for tpu_custom_call.1']
    #allocation6 [shape = 'u8[512]{0}', space=smem, size = 0x200, scoped, tag = 'input window, operand 1, single buffered']
    #allocation7 [shape = 'u8[2048]{0}', space=vmem, size = 0x800, scoped, tag = 'output window, operand 0, single buffered']
    %8 = vsyncpa [#allocation4], 0
    %9 = vsyncpa [#allocation5], 0
    %10 = vsyncpa [#allocation3], 0
    // Predicated region
    $region2: #{tpu_custom_call.1} parent=1 // pred_check
      _
    $region3: #{tpu_custom_call.1} parent=1 // pred_check_branch
      %12 = sbr.rel (0) target = $region5
    $region4: #{tpu_custom_call.1} parent=1 // pred_region
      %s14 = ssub.s32 64, 64
      %15 = vsyncadd [#allocation4], %s14
      %18 = dma.hbm_to_smem %s0, 64, [#allocation2], [#allocation4]
    $region5: #{tpu_custom_call.1} parent=1 // pred_fallthru
      _
    // Predicated region
    $region6: #{tpu_custom_call.1} parent=1 // pred_check
      _
    $region7: #{tpu_custom_call.1} parent=1 // pred_check_branch
      %20 = sbr.rel (0) target = $region9
    $region8: #{tpu_custom_call.1} parent=1 // pred_region
      %s22 = ssub.s32 16, 16
      %23 = vsyncadd [#allocation5], %s22
      %s25 = sshll.u32 %s1, 4
      %s26 = int_to_ptr.vmem [resolvable:$true] %s25
      %28 = dma.vmem_to_smem %s26, 16, [#allocation6], [#allocation5]
    $region9: #{tpu_custom_call.1} parent=1 // pred_fallthru
      _
    // Predicated region
    $region10: #{tpu_custom_call.1} parent=1 // pred_check
      _
    $region11: #{tpu_custom_call.1} parent=1 // pred_check_branch
      %30 = sbr.rel (0) target = $region13
    $region12: #{tpu_custom_call.1} parent=1 // pred_region
      _
    $region13: #{tpu_custom_call.1} parent=1 // pred_fallthru
      _
    // Predicated region
    $region14: #{tpu_custom_call.1} parent=1 // pred_check
      _
    $region15: #{tpu_custom_call.1} parent=1 // pred_check_branch
      %32 = sbr.rel (0) target = $region17
    $region16: #{tpu_custom_call.1} parent=1 // pred_region
      %33 = dma.done [#allocation4], 64
    $region17: #{tpu_custom_call.1} parent=1 // pred_fallthru
      _
    // Predicated region
    $region18: #{tpu_custom_call.1} parent=1 // pred_check
      _
    $region19: #{tpu_custom_call.1} parent=1 // pred_check_branch
      %35 = sbr.rel (0) target = $region21
    $region20: #{tpu_custom_call.1} parent=1 // pred_region
      %36 = dma.done [#allocation5], 16
    $region21: #{tpu_custom_call.1} parent=1 // pred_fallthru
      _
    %37 = sfence
    %v38 = vld [vmem:[%s2] sm:$0x1]
    %v39 = vld [vmem:[%s2 + $0x1] sm:$0x1]
    %v40 = vld [vmem:[%s2 + $0x2] sm:$0x1]
    %v41 = vld [vmem:[%s2 + $0x3] sm:$0x1]
    %s42 = sld [smem:[#allocation2]]
    %v43 = vstv %s42
    %v44 = vmul.f32 %v38, %v43
    %s45 = sld [smem:[#allocation2 + $0x1]]
    %v46 = vstv %s45
    %v47 = vmul.f32 %v39, %v46
    %v48 = vadd.f32 %v44, %v47
    %s49 = sld [smem:[#allocation2 + $0x2]]
    %v50 = vstv %s49
    %v51 = vmul.f32 %v40, %v50
    %v52 = vadd.f32 %v48, %v51
    %s53 = sld [smem:[#allocation2 + $0x3]]
    %v54 = vstv %s53
    %v55 = vmul.f32 %v41, %v54
    %v56 = vadd.f32 %v52, %v55
    %s57 = sld [smem:[#allocation6]]
    %v58 = vstv %s57
    %v59 = vadd.f32 %v56, %v58
    %s60 = sld [smem:[#allocation2 + $0x80]]
    %v61 = vstv %s60
    %v62 = vmul.f32 %v38, %v61
    %s63 = sld [smem:[#allocation2 + $0x81]]
    %v64 = vstv %s63
    %v65 = vmul.f32 %v39, %v64
    %v66 = vadd.f32 %v62, %v65
    %s67 = sld [smem:[#allocation2 + $0x82]]
    %v68 = vstv %s67
    %v69 = vmul.f32 %v40, %v68
    %v70 = vadd.f32 %v66, %v69
    %s71 = sld [smem:[#allocation2 + $0x83]]
    %v72 = vstv %s71
    %v73 = vmul.f32 %v41, %v72
    %v74 = vadd.f32 %v70, %v73
    %s75 = sld [smem:[#allocation6 + $0x1]]
    %v76 = vstv %s75
    %v77 = vadd.f32 %v74, %v76
    %s78 = sld [smem:[#allocation2 + $0x100]]
    %v79 = vstv %s78
    %v80 = vmul.f32 %v38, %v79
    %s81 = sld [smem:[#allocation2 + $0x101]]
    %v82 = vstv %s81
    %v83 = vmul.f32 %v39, %v82
    %v84 = vadd.f32 %v80, %v83
    %s85 = sld [smem:[#allocation2 + $0x102]]
    %v86 = vstv %s85
    %v87 = vmul.f32 %v40, %v86
    %v88 = vadd.f32 %v84, %v87
    %s89 = sld [smem:[#allocation2 + $0x103]]
    %v90 = vstv %s89
    %v91 = vmul.f32 %v41, %v90
    %v92 = vadd.f32 %v88, %v91
    %s93 = sld [smem:[#allocation6 + $0x2]]
    %v94 = vstv %s93
    %v95 = vadd.f32 %v92, %v94
    %s96 = sld [smem:[#allocation2 + $0x180]]
    %v97 = vstv %s96
    %v98 = vmul.f32 %v38, %v97
    %s99 = sld [smem:[#allocation2 + $0x181]]
    %v100 = vstv %s99
    %v101 = vmul.f32 %v39, %v100
    %v102 = vadd.f32 %v98, %v101
    %s103 = sld [smem:[#allocation2 + $0x182]]
    %v104 = vstv %s103
    %v105 = vmul.f32 %v40, %v104
    %v106 = vadd.f32 %v102, %v105
    %s107 = sld [smem:[#allocation2 + $0x183]]
    %v108 = vstv %s107
    %v109 = vmul.f32 %v41, %v108
    %v110 = vadd.f32 %v106, %v109
    %s111 = sld [smem:[#allocation6 + $0x3]]
    %v112 = vstv %s111
    %v113 = vadd.f32 %v110, %v112
    %v115 = vrot.slane %v77, 7
    %v118 = vrot.slane %v95, 6
    %v121 = vrot.slane %v113, 5
    %vm123 = vcmask 1040384
    %v124 = vsel %vm123, %v59, %v115
    %vm125 = vcmask 1041408
    %v126 = vsel %vm125, %v124, %v118
    %vm127 = vcmask 1042432
    %v128 = vsel %vm127, %v126, %v121
    %vm129 = vcmask 60416
    %130 = vst.msk [vmem:[#allocation7] sm:$0xf] %vm129, %v128
    // Predicated region
    $region22: #{tpu_custom_call.1} parent=1 // pred_check
      _
    $region23: #{tpu_custom_call.1} parent=1 // pred_check_branch
      %132 = sbr.rel (0) target = $region25
    $region24: #{tpu_custom_call.1} parent=1 // pred_region
      %s134 = ssub.s32 64, 64
      %135 = vsyncadd [#allocation3], %s134
      %s137 = sshll.u32 [#allocation7], 4
      %s138 = int_to_ptr.vmem [resolvable:$true] %s137
      %140 = dma.vmem_to_hbm [thread:$0]  %s138, 64, %s3, [#allocation3]
    $region25: #{tpu_custom_call.1} parent=1 // pred_fallthru
      _
    // Predicated region
    $region26: #{tpu_custom_call.1} parent=1 // pred_check
      _
    $region27: #{tpu_custom_call.1} parent=1 // pred_check_branch
      %142 = sbr.rel (0) target = $region29
    $region28: #{tpu_custom_call.1} parent=1 // pred_region
      %143 = dma.done [#allocation3], 64
    $region29: #{tpu_custom_call.1} parent=1 // pred_fallthru
      _
    %144 = vsyncpa [#allocation3], 1
    %145 = vsyncpa [#allocation4], 1
    %146 = vsyncpa [#allocation5], 1

</llo_original>
